<compile_context>
chip_gen: v6e
topology: v6e:2x2x1
jax: 0.10.0
libtpu: 0.0.40
codegen_flags: <defaults>
</compile_context>

<pallas_src>
import functools

import jax
import jax.numpy as jnp
from jax.experimental import pallas as pl
from jax.experimental.pallas import tpu as pltpu


def _vae_loss_kernel(recon_ref, img_ref, txt_ref, mean_ref, var_ref, out_ref,
                     *, f_img, batch, tile_b, tiles_per_core):
    c = pl.program_id(0)          # core (parallel)
    t = pl.program_id(1)          # batch tile (arbitrary / reduction)

    @pl.when(t == 0)
    def _init():
        out_ref[...] = jnp.zeros_like(out_ref)

    # Row-validity mask: covers the ragged last tile and any clamped duplicate
    # tile when the tile count does not split evenly across cores.
    tile_idx = c * tiles_per_core + t
    row = tile_idx * tile_b + jax.lax.broadcasted_iota(jnp.int32, (tile_b, 1), 0)
    valid = row < batch

    # Reconstruction loss: sum of squared error (MSELoss(size_average=False)).
    # Cast to f32 in-kernel; slice the recon tile against img/txt streams.
    recon = recon_ref[...].astype(jnp.float32)
    d_img = recon[:, :f_img] - img_ref[...].astype(jnp.float32)
    d_txt = recon[:, f_img:] - txt_ref[...].astype(jnp.float32)
    rec_partial = (jnp.sum(jnp.where(valid, d_img * d_img, 0.0)) +
                   jnp.sum(jnp.where(valid, d_txt * d_txt, 0.0)))

    # KL term: 0.5 * sum(exp(logvar) + mean^2 - 1 - logvar).
    # mean/var are tiled over the same batch axis, so each element is reduced
    # exactly once (no re-reduction per grid step); exp runs on the EUP slot.
    v = var_ref[...].astype(jnp.float32)
    m = mean_ref[...].astype(jnp.float32)
    kl_partial = 0.5 * jnp.sum(jnp.where(valid, jnp.exp(v) + m * m - 1.0 - v, 0.0))

    # Accumulate the two scalars into the lane-dense resident output block:
    # rec at [0, 0, 0], kl at [0, 0, 1].
    sub = jax.lax.broadcasted_iota(jnp.int32, (1, 8, 128), 1)
    lane = jax.lax.broadcasted_iota(jnp.int32, (1, 8, 128), 2)
    contrib = (jnp.where((sub == 0) & (lane == 0), rec_partial, 0.0) +
               jnp.where((sub == 0) & (lane == 1), kl_partial, 0.0))
    out_ref[...] += contrib


_TILE_BYTE_BUDGET = 4 * 1024 * 1024   # bytes per tile across all five inputs


def vae_loss(output):
    """output: dict with 'reconstruct_input', 'normalized_image_input',
    'normalized_text_input', 'mean', 'var'. Returns dict of scalar losses."""
    recon = output['reconstruct_input']
    img = output['normalized_image_input']
    txt = output['normalized_text_input']
    mean = output['mean']
    var = output['var']

    batch, n_feat = recon.shape
    f_img = img.shape[1]
    f_txt = txt.shape[1]
    latent = mean.shape[1]
    assert f_img + f_txt == n_feat
    assert mean.shape == var.shape == (batch, latent)

    bytes_per_row = (n_feat * jnp.dtype(recon.dtype).itemsize
                     + f_img * jnp.dtype(img.dtype).itemsize
                     + f_txt * jnp.dtype(txt.dtype).itemsize
                     + 2 * latent * jnp.dtype(mean.dtype).itemsize)
    cap = max(8, _TILE_BYTE_BUDGET // max(bytes_per_row, 1))
    if batch <= cap:
        tile_b = batch                       # single full-extent batch block
    else:
        tile_b = max(8, min(1024, (cap // 8) * 8))   # multiple of 8 sublanes

    num_tiles = -(-batch // tile_b)
    n_cores = 2 if num_tiles >= 2 else 1     # v7x: split batch across 2 TCs
    tiles_per_core = -(-num_tiles // n_cores)

    def row_map(c, t):
        # Clamp so a ragged core split never requests an OOB block; duplicated
        # tiles contribute zero through the in-kernel row mask.
        return (jnp.minimum(c * tiles_per_core + t, num_tiles - 1), 0)

    kernel = functools.partial(
        _vae_loss_kernel, f_img=f_img, batch=batch, tile_b=tile_b,
        tiles_per_core=tiles_per_core)

    partials = pl.pallas_call(
        kernel,
        grid=(n_cores, tiles_per_core),
        in_specs=[
            pl.BlockSpec((tile_b, n_feat), row_map),
            pl.BlockSpec((tile_b, f_img), row_map),
            pl.BlockSpec((tile_b, f_txt), row_map),
            pl.BlockSpec((tile_b, latent), row_map),
            pl.BlockSpec((tile_b, latent), row_map),
        ],
        out_specs=pl.BlockSpec((1, 8, 128), lambda c, t: (c, 0, 0)),
        out_shape=jax.ShapeDtypeStruct((n_cores, 8, 128), jnp.float32),
        compiler_params=pltpu.CompilerParams(
            dimension_semantics=("parallel", "arbitrary")),
    )(recon, img, txt, mean, var)

    rec = jnp.sum(partials[:, 0, 0])
    kl = jnp.sum(partials[:, 0, 1])
    total = (0.1 * kl + rec) / batch
    return {'total_loss': total, 'kl_loss': kl, 'reconstruction_loss': rec}


def _reference(output):
    recon = output['reconstruct_input'].astype(jnp.float32)
    origin = jnp.concatenate(
        [output['normalized_image_input'], output['normalized_text_input']],
        axis=1).astype(jnp.float32)
    batch_size = recon.shape[0]
    rec = jnp.sum((recon - origin) ** 2)
    v = output['var'].astype(jnp.float32)
    m = output['mean'].astype(jnp.float32)
    kl = 0.5 * jnp.sum(jnp.exp(v) + m ** 2 - 1.0 - v)
    return {'total_loss': (0.1 * kl + rec) / batch_size,
            'kl_loss': kl,
            'reconstruction_loss': rec}


if __name__ == "__main__":
    key = jax.random.PRNGKey(0)
    k1, k2, k3, k4, k5 = jax.random.split(key, 5)

    B, F_IMG, F_TXT, LATENT = 2, 16, 16, 8
    F = F_IMG + F_TXT

    output = {
        'reconstruct_input': jax.random.normal(k1, (B, F), jnp.float32),
        'normalized_image_input': jax.random.normal(k2, (B, F_IMG), jnp.float32),
        'normalized_text_input': jax.random.normal(k3, (B, F_TXT), jnp.float32),
        'mean': jax.random.normal(k4, (B, LATENT), jnp.float32),
        'var': jax.random.normal(k5, (B, LATENT), jnp.float32),
    }

    got = jax.block_until_ready(vae_loss(output))
    ref = _reference(output)

    for name in ('total_loss', 'kl_loss', 'reconstruction_loss'):
        assert jnp.allclose(got[name], ref[name], rtol=1e-5, atol=1e-5), (
            name, got[name], ref[name])

    print("KERNEL_OK")
</pallas_src>

<mosaic_0001>
module attributes {stable_mosaic.version = 11 : i64} {
  func.func @_vae_loss_kernel(%arg0: i32, %arg1: i32, %arg2: memref<2x32xf32, #tpu.memory_space<vmem>>, %arg3: memref<2x16xf32, #tpu.memory_space<vmem>>, %arg4: memref<2x16xf32, #tpu.memory_space<vmem>>, %arg5: memref<2x8xf32, #tpu.memory_space<vmem>>, %arg6: memref<2x8xf32, #tpu.memory_space<vmem>>, %arg7: memref<1x8x128xf32, #tpu.memory_space<vmem>>) attributes {dimension_semantics = [#tpu.dimension_semantics<parallel>, #tpu.dimension_semantics<arbitrary>], iteration_bounds = array<i64: 1, 1>, scalar_prefetch = 0 : i64, scratch_operands = 0 : i64, tpu.core_type = #tpu.core_type<tc>, window_params = [{transform_indices = @transform_0, window_bounds = array<i64: 2, 32>}, {transform_indices = @transform_1, window_bounds = array<i64: 2, 16>}, {transform_indices = @transform_2, window_bounds = array<i64: 2, 16>}, {transform_indices = @transform_3, window_bounds = array<i64: 2, 8>}, {transform_indices = @transform_4, window_bounds = array<i64: 2, 8>}, {transform_indices = @transform_5, window_bounds = array<i64: 1, 8, 128>}]} {
    %c0_i32 = arith.constant 0 : i32
    %0 = arith.cmpi eq, %arg1, %c0_i32 : i32
    %1 = arith.extui %0 : i1 to i32
    %c0_i32_0 = arith.constant 0 : i32
    %2 = arith.cmpi ne, %1, %c0_i32_0 : i32
    scf.if %2 {
      %cst_30 = arith.constant 0.000000e+00 : f32
      %76 = vector.broadcast %cst_30 : f32 to vector<1x8x128xf32>
      %c0_31 = arith.constant 0 : index
      %c0_32 = arith.constant 0 : index
      %c0_33 = arith.constant 0 : index
      %77 = vector.load %arg7[%c0_31, %c0_32, %c0_33] : memref<1x8x128xf32, #tpu.memory_space<vmem>>, vector<1x8x128xf32>
      tpu.vector_store %arg7[%c0_31, %c0_32, %c0_33], %76 {strides = array<i32>} : memref<1x8x128xf32, #tpu.memory_space<vmem>>, vector<1x8x128xf32>,
    } else {
    }
    %c1_i32 = arith.constant 1 : i32
    %3 = arith.muli %arg0, %c1_i32 : i32
    %4 = arith.addi %3, %arg1 : i32
    %c2_i32 = arith.constant 2 : i32
    %5 = arith.muli %4, %c2_i32 : i32
    %6 = tpu.iota {dimensions = array<i32: 0>} : vector<2x1xi32>
    %7 = vector.broadcast %5 : i32 to vector<2x1xi32>
    %8 = arith.addi %7, %6 : vector<2x1xi32>
    %c2_i32_1 = arith.constant 2 : i32
    %9 = vector.broadcast %c2_i32_1 : i32 to vector<2x1xi32>
    %10 = arith.cmpi slt, %8, %9 : vector<2x1xi32>
    %c0 = arith.constant 0 : index
    %c0_2 = arith.constant 0 : index
    %11 = vector.load %arg2[%c0, %c0_2] : memref<2x32xf32, #tpu.memory_space<vmem>>, vector<2x32xf32>
    %12 = vector.extract_strided_slice %11 {offsets = [0, 0], sizes = [2, 16], strides = [1, 1]} : vector<2x32xf32> to vector<2x16xf32>
    %c0_3 = arith.constant 0 : index
    %c0_4 = arith.constant 0 : index
    %13 = vector.load %arg3[%c0_3, %c0_4] : memref<2x16xf32, #tpu.memory_space<vmem>>, vector<2x16xf32>
    %14 = arith.subf %12, %13 : vector<2x16xf32>
    %15 = vector.extract_strided_slice %11 {offsets = [0, 16], sizes = [2, 16], strides = [1, 1]} : vector<2x32xf32> to vector<2x16xf32>
    %c0_5 = arith.constant 0 : index
    %c0_6 = arith.constant 0 : index
    %16 = vector.load %arg4[%c0_5, %c0_6] : memref<2x16xf32, #tpu.memory_space<vmem>>, vector<2x16xf32>
    %17 = arith.subf %15, %16 : vector<2x16xf32>
    %18 = arith.mulf %14, %14 : vector<2x16xf32>
    %cst = arith.constant 0.000000e+00 : f32
    %19 = vector.shape_cast %10 : vector<2x1xi1> to vector<2x1xi1>
    %20 = vector.broadcast %19 : vector<2x1xi1> to vector<2x16xi1>
    %21 = vector.broadcast %cst : f32 to vector<2x16xf32>
    %22 = arith.select %20, %18, %21 : vector<2x16xi1>, vector<2x16xf32>
    %23 = vector.shape_cast %22 : vector<2x16xf32> to vector<1x2x16xf32>
    %cst_7 = arith.constant dense<0.000000e+00> : vector<1xf32>
    %24 = vector.multi_reduction <add>, %23, %cst_7 [1, 2] : vector<1x2x16xf32> to vector<1xf32>
    %25 = vector.shape_cast %24 : vector<1xf32> to vector<1x1x1xf32>
    %26 = vector.extract %25[0, 0, 0] : f32 from vector<1x1x1xf32>
    %27 = arith.mulf %17, %17 : vector<2x16xf32>
    %cst_8 = arith.constant 0.000000e+00 : f32
    %28 = vector.shape_cast %10 : vector<2x1xi1> to vector<2x1xi1>
    %29 = vector.broadcast %28 : vector<2x1xi1> to vector<2x16xi1>
    %30 = vector.broadcast %cst_8 : f32 to vector<2x16xf32>
    %31 = arith.select %29, %27, %30 : vector<2x16xi1>, vector<2x16xf32>
    %32 = vector.shape_cast %31 : vector<2x16xf32> to vector<1x2x16xf32>
    %cst_9 = arith.constant dense<0.000000e+00> : vector<1xf32>
    %33 = vector.multi_reduction <add>, %32, %cst_9 [1, 2] : vector<1x2x16xf32> to vector<1xf32>
    %34 = vector.shape_cast %33 : vector<1xf32> to vector<1x1x1xf32>
    %35 = vector.extract %34[0, 0, 0] : f32 from vector<1x1x1xf32>
    %36 = arith.addf %26, %35 : f32
    %c0_10 = arith.constant 0 : index
    %c0_11 = arith.constant 0 : index
    %37 = vector.load %arg6[%c0_10, %c0_11] : memref<2x8xf32, #tpu.memory_space<vmem>>, vector<2x8xf32>
    %c0_12 = arith.constant 0 : index
    %c0_13 = arith.constant 0 : index
    %38 = vector.load %arg5[%c0_12, %c0_13] : memref<2x8xf32, #tpu.memory_space<vmem>>, vector<2x8xf32>
    %39 = math.exp %37 : vector<2x8xf32>
    %40 = arith.mulf %38, %38 : vector<2x8xf32>
    %41 = arith.addf %39, %40 : vector<2x8xf32>
    %cst_14 = arith.constant 1.000000e+00 : f32
    %42 = vector.broadcast %cst_14 : f32 to vector<2x8xf32>
    %43 = arith.subf %41, %42 : vector<2x8xf32>
    %44 = arith.subf %43, %37 : vector<2x8xf32>
    %cst_15 = arith.constant 0.000000e+00 : f32
    %45 = vector.shape_cast %10 : vector<2x1xi1> to vector<2x1xi1>
    %46 = vector.broadcast %45 : vector<2x1xi1> to vector<2x8xi1>
    %47 = vector.broadcast %cst_15 : f32 to vector<2x8xf32>
    %48 = arith.select %46, %44, %47 : vector<2x8xi1>, vector<2x8xf32>
    %49 = vector.shape_cast %48 : vector<2x8xf32> to vector<1x2x8xf32>
    %cst_16 = arith.constant dense<0.000000e+00> : vector<1xf32>
    %50 = vector.multi_reduction <add>, %49, %cst_16 [1, 2] : vector<1x2x8xf32> to vector<1xf32>
    %51 = vector.shape_cast %50 : vector<1xf32> to vector<1x1x1xf32>
    %52 = vector.extract %51[0, 0, 0] : f32 from vector<1x1x1xf32>
    %cst_17 = arith.constant 5.000000e-01 : f32
    %53 = arith.mulf %cst_17, %52 : f32
    %54 = tpu.iota {dimensions = array<i32: 1>} : vector<1x8x128xi32>
    %55 = tpu.iota {dimensions = array<i32: 2>} : vector<1x8x128xi32>
    %c0_i32_18 = arith.constant 0 : i32
    %56 = vector.broadcast %c0_i32_18 : i32 to vector<1x8x128xi32>
    %57 = arith.cmpi eq, %54, %56 : vector<1x8x128xi32>
    %c0_i32_19 = arith.constant 0 : i32
    %58 = vector.broadcast %c0_i32_19 : i32 to vector<1x8x128xi32>
    %59 = arith.cmpi eq, %55, %58 : vector<1x8x128xi32>
    %60 = arith.andi %57, %59 : vector<1x8x128xi1>
    %cst_20 = arith.constant 0.000000e+00 : f32
    %61 = vector.broadcast %36 : f32 to vector<1x8x128xf32>
    %62 = vector.broadcast %cst_20 : f32 to vector<1x8x128xf32>
    %63 = arith.select %60, %61, %62 : vector<1x8x128xi1>, vector<1x8x128xf32>
    %c0_i32_21 = arith.constant 0 : i32
    %64 = vector.broadcast %c0_i32_21 : i32 to vector<1x8x128xi32>
    %65 = arith.cmpi eq, %54, %64 : vector<1x8x128xi32>
    %c1_i32_22 = arith.constant 1 : i32
    %66 = vector.broadcast %c1_i32_22 : i32 to vector<1x8x128xi32>
    %67 = arith.cmpi eq, %55, %66 : vector<1x8x128xi32>
    %68 = arith.andi %65, %67 : vector<1x8x128xi1>
    %cst_23 = arith.constant 0.000000e+00 : f32
    %69 = vector.broadcast %53 : f32 to vector<1x8x128xf32>
    %70 = vector.broadcast %cst_23 : f32 to vector<1x8x128xf32>
    %71 = arith.select %68, %69, %70 : vector<1x8x128xi1>, vector<1x8x128xf32>
    %72 = arith.addf %63, %71 : vector<1x8x128xf32>
    %c0_24 = arith.constant 0 : index
    %c0_25 = arith.constant 0 : index
    %c0_26 = arith.constant 0 : index
    %73 = vector.load %arg7[%c0_24, %c0_25, %c0_26] : memref<1x8x128xf32, #tpu.memory_space<vmem>>, vector<1x8x128xf32>
    %74 = arith.addf %73, %72 : vector<1x8x128xf32>
    %c0_27 = arith.constant 0 : index
    %c0_28 = arith.constant 0 : index
    %c0_29 = arith.constant 0 : index
    %75 = vector.load %arg7[%c0_27, %c0_28, %c0_29] : memref<1x8x128xf32, #tpu.memory_space<vmem>>, vector<1x8x128xf32>
    tpu.vector_store %arg7[%c0_27, %c0_28, %c0_29], %74 {strides = array<i32>} : memref<1x8x128xf32, #tpu.memory_space<vmem>>, vector<1x8x128xf32>,
    return
  }
  func.func @transform_0(%arg0: i32, %arg1: i32) -> (i32, i32) {
    %c1_i32 = arith.constant 1 : i32
    %0 = arith.muli %arg0, %c1_i32 : i32
    %1 = arith.addi %0, %arg1 : i32
    %c0_i32 = arith.constant 0 : i32
    %2 = arith.minsi %1, %c0_i32 : i32
    %c0_i32_0 = arith.constant 0 : i32
    %c0_i32_1 = arith.constant 0 : i32
    return %2, %c0_i32_0 : i32, i32
  }
  func.func @transform_1(%arg0: i32, %arg1: i32) -> (i32, i32) {
    %c1_i32 = arith.constant 1 : i32
    %0 = arith.muli %arg0, %c1_i32 : i32
    %1 = arith.addi %0, %arg1 : i32
    %c0_i32 = arith.constant 0 : i32
    %2 = arith.minsi %1, %c0_i32 : i32
    %c0_i32_0 = arith.constant 0 : i32
    %c0_i32_1 = arith.constant 0 : i32
    return %2, %c0_i32_0 : i32, i32
  }
  func.func @transform_2(%arg0: i32, %arg1: i32) -> (i32, i32) {
    %c1_i32 = arith.constant 1 : i32
    %0 = arith.muli %arg0, %c1_i32 : i32
    %1 = arith.addi %0, %arg1 : i32
    %c0_i32 = arith.constant 0 : i32
    %2 = arith.minsi %1, %c0_i32 : i32
    %c0_i32_0 = arith.constant 0 : i32
    %c0_i32_1 = arith.constant 0 : i32
    return %2, %c0_i32_0 : i32, i32
  }
  func.func @transform_3(%arg0: i32, %arg1: i32) -> (i32, i32) {
    %c1_i32 = arith.constant 1 : i32
    %0 = arith.muli %arg0, %c1_i32 : i32
    %1 = arith.addi %0, %arg1 : i32
    %c0_i32 = arith.constant 0 : i32
    %2 = arith.minsi %1, %c0_i32 : i32
    %c0_i32_0 = arith.constant 0 : i32
    %c0_i32_1 = arith.constant 0 : i32
    return %2, %c0_i32_0 : i32, i32
  }
  func.func @transform_4(%arg0: i32, %arg1: i32) -> (i32, i32) {
    %c1_i32 = arith.constant 1 : i32
    %0 = arith.muli %arg0, %c1_i32 : i32
    %1 = arith.addi %0, %arg1 : i32
    %c0_i32 = arith.constant 0 : i32
    %2 = arith.minsi %1, %c0_i32 : i32
    %c0_i32_0 = arith.constant 0 : i32
    %c0_i32_1 = arith.constant 0 : i32
    return %2, %c0_i32_0 : i32, i32
  }
  func.func @transform_5(%arg0: i32, %arg1: i32) -> (i32, i32, i32) {
    %c0_i32 = arith.constant 0 : i32
    %c0_i32_0 = arith.constant 0 : i32
    %c0_i32_1 = arith.constant 0 : i32
    return %arg0, %c0_i32, %c0_i32_0 : i32, i32, i32
  }
}

</mosaic_0001>

<llo_original>
// kernel: tpu_custom_call.1
$region0: #{tpu_custom_call.1}
  #allocation0 [shape = 'u32[]', space=smem, size = 0x4, offset = 0x4, fixed_abs, tag = 'smem constant byte address 0x4 - core index']
  #allocation1 [shape = 'u32[144,128]{1,0:T(1,128)}', space=vmem, size = 0x12000, scoped, tag = 'internal scratch']
  %s0 = inlined_call_operand.hbm [shape: f32[2,32], index: 0, kind: input, shape index: {}]
  %s1 = inlined_call_operand.hbm [shape: f32[2,16], index: 1, kind: input, shape index: {}]
  %s2 = inlined_call_operand.vmem [shape: f32[2,16], index: 2, kind: input, shape index: {}]
  %s3 = inlined_call_operand.vmem [shape: f32[2,8], index: 3, kind: input, shape index: {}]
  %s4 = inlined_call_operand.vmem [shape: f32[2,8], index: 4, kind: input, shape index: {}]
  %s5 = inlined_call_operand.hbm [shape: f32[1,8,128], index: 5, kind: output, shape index: {}]
  %s6 = sld [smem:[#allocation0]]
  $region42: #{tpu_custom_call.1} parent=0
    _
  %s8 = ssub.s32 1, %s6
  %s9 = scalar_select 0, %s8, %s6
  $region1: #{tpu_custom_call.1} parent=0
    #allocation2 [shape = 'u8[1024]{0}', space=vmem, size = 0x400, scoped, tag = 'input window, operand 0, single buffered']
    #allocation3 [shape = 's32[1]{0}', space=sflag, size = 0x4, scoped, tag = 'scoped memory for tpu_custom_call.1']
    #allocation4 [shape = 's32[1]{0}', space=sflag, size = 0x4, scoped, tag = 'scoped memory for tpu_custom_call.1']
    #allocation5 [shape = 'u8[1024]{0}', space=vmem, size = 0x400, scoped, tag = 'input window, operand 1, single buffered']
    #allocation6 [shape = 's32[1]{0}', space=sflag, size = 0x4, scoped, tag = 'scoped memory for tpu_custom_call.1']
    #allocation7 [shape = 'u8[4096]{0}', space=vmem, size = 0x1000, scoped, tag = 'output window, operand 0, single buffered']
    %10 = vsyncpa [#allocation3], 0
    %11 = vsyncpa [#allocation6], 0
    %12 = vsyncpa [#allocation4], 0
    // Predicated region
    $region2: #{tpu_custom_call.1} parent=1 // pred_check
      _
    $region3: #{tpu_custom_call.1} parent=1 // pred_check_branch
      %14 = sbr.rel (0) target = $region5
    $region4: #{tpu_custom_call.1} parent=1 // pred_region
      %s15 = sadd.s32 0, 0
      %p16 = scmp.lt.s32.totalorder %s15, 0
      %s17 = scalar_select %p16, %s15, 0
      %s19 = ssub.s32 32, 32
      %20 = vsyncadd [#allocation3], %s19
      %s21 = smul.addr %s17, 32
      %s22 = scalar_lea.hbm %s0, %s21
      %s24 = sshll.u32 [#allocation2], 4
      %s25 = int_to_ptr.vmem [resolvable:$true] %s24
      %27 = dma.hbm_to_vmem [thread:$0]  %s22, 32, %s25, [#allocation3]
    $region5: #{tpu_custom_call.1} parent=1 // pred_fallthru
      _
    // Predicated region
    $region6: #{tpu_custom_call.1} parent=1 // pred_check
      _
    $region7: #{tpu_custom_call.1} parent=1 // pred_check_branch
      %29 = sbr.rel (0) target = $region9
    $region8: #{tpu_custom_call.1} parent=1 // pred_region
      %s30 = sadd.s32 0, 0
      %p31 = scmp.lt.s32.totalorder %s30, 0
      %s32 = scalar_select %p31, %s30, 0
      %s34 = ssub.s32 32, 32
      %35 = vsyncadd [#allocation6], %s34
      %s36 = smul.addr %s32, 32
      %s37 = scalar_lea.hbm %s1, %s36
      %s39 = sshll.u32 [#allocation5], 4
      %s40 = int_to_ptr.vmem [resolvable:$true] %s39
      %42 = dma.hbm_to_vmem [thread:$0]  %s37, 32, %s40, [#allocation6]
    $region9: #{tpu_custom_call.1} parent=1 // pred_fallthru
      _
    // Predicated region
    $region10: #{tpu_custom_call.1} parent=1 // pred_check
      _
    $region11: #{tpu_custom_call.1} parent=1 // pred_check_branch
      %44 = sbr.rel (0) target = $region13
    $region12: #{tpu_custom_call.1} parent=1 // pred_region
      %s45 = sadd.s32 0, 0
      %p46 = scmp.lt.s32.totalorder %s45, 0
      %s47 = scalar_select %p46, %s45, 0
      %p48 = scmp.lt.s32.totalorder %s47, 0
      %s49 = scalar_select %p48, %s47, 0
      %s50 = smul.addr %s49, 2
      %s51 = scalar_lea.vmem %s2, %s50
      %s52 = sadd.s32 0, 0
      %p53 = scmp.lt.s32.totalorder %s52, 0
      %s54 = scalar_select %p53, %s52, 0
    $region13: #{tpu_custom_call.1} parent=1 // pred_fallthru
      _
    // Predicated region
    $region14: #{tpu_custom_call.1} parent=1 // pred_check
      _
    $region15: #{tpu_custom_call.1} parent=1 // pred_check_branch
      %56 = sbr.rel (0) target = $region17
    $region16: #{tpu_custom_call.1} parent=1 // pred_region
      %s57 = sadd.s32 0, 0
      %p58 = scmp.lt.s32.totalorder %s57, 0
      %s59 = scalar_select %p58, %s57, 0
      %p60 = scmp.lt.s32.totalorder %s59, 0
      %s61 = scalar_select %p60, %s59, 0
      %s62 = smul.addr %s61, 2
      %s63 = scalar_lea.vmem %s3, %s62
      %s64 = sadd.s32 0, 0
      %p65 = scmp.lt.s32.totalorder %s64, 0
      %s66 = scalar_select %p65, %s64, 0
    $region17: #{tpu_custom_call.1} parent=1 // pred_fallthru
      _
    // Predicated region
    $region18: #{tpu_custom_call.1} parent=1 // pred_check
      _
    $region19: #{tpu_custom_call.1} parent=1 // pred_check_branch
      %68 = sbr.rel (0) target = $region21
    $region20: #{tpu_custom_call.1} parent=1 // pred_region
      %s69 = sadd.s32 0, 0
      %p70 = scmp.lt.s32.totalorder %s69, 0
      %s71 = scalar_select %p70, %s69, 0
      %p72 = scmp.lt.s32.totalorder %s71, 0
      %s73 = scalar_select %p72, %s71, 0
      %s74 = smul.addr %s73, 2
      %s75 = scalar_lea.vmem %s4, %s74
      %s76 = sadd.s32 0, 0
      %p77 = scmp.lt.s32.totalorder %s76, 0
      %s78 = scalar_select %p77, %s76, 0
    $region21: #{tpu_custom_call.1} parent=1 // pred_fallthru
      _
    // Predicated region
    $region22: #{tpu_custom_call.1} parent=1 // pred_check
      _
    $region23: #{tpu_custom_call.1} parent=1 // pred_check_branch
      %80 = sbr.rel (0) target = $region25
    $region24: #{tpu_custom_call.1} parent=1 // pred_region
      %81 = dma.done [#allocation3], 32
    $region25: #{tpu_custom_call.1} parent=1 // pred_fallthru
      _
    // Predicated region
    $region26: #{tpu_custom_call.1} parent=1 // pred_check
      _
    $region27: #{tpu_custom_call.1} parent=1 // pred_check_branch
      %83 = sbr.rel (0) target = $region29
    $region28: #{tpu_custom_call.1} parent=1 // pred_region
      %84 = dma.done [#allocation6], 32
    $region29: #{tpu_custom_call.1} parent=1 // pred_fallthru
      _
    %s85 = sadd.s32 0, 0
    %p86 = scmp.lt.s32.totalorder %s85, 0
    %s87 = scalar_select %p86, %s85, 0
    %p88 = scmp.lt.s32.totalorder %s87, 0
    %s89 = scalar_select %p88, %s87, 0
    %s90 = smul.addr %s89, 2
    %s91 = scalar_lea.vmem %s2, %s90
    %s92 = sadd.s32 0, 0
    %p93 = scmp.lt.s32.totalorder %s92, 0
    %s94 = scalar_select %p93, %s92, 0
    %p95 = scmp.lt.s32.totalorder %s94, 0
    %s96 = scalar_select %p95, %s94, 0
    %s97 = smul.addr %s96, 2
    %s98 = scalar_lea.vmem %s3, %s97
    %s99 = sadd.s32 0, 0
    %p100 = scmp.lt.s32.totalorder %s99, 0
    %s101 = scalar_select %p100, %s99, 0
    %p102 = scmp.lt.s32.totalorder %s101, 0
    %s103 = scalar_select %p102, %s101, 0
    %s104 = smul.addr %s103, 2
    %s105 = scalar_lea.vmem %s4, %s104
    %s106 = sadd.s32 0, 0
    %p107 = scmp.lt.s32.totalorder %s106, 0
    %s108 = scalar_select %p107, %s106, 0
    %s109 = sadd.s32 0, 0
    %p110 = scmp.lt.s32.totalorder %s109, 0
    %s111 = scalar_select %p110, %s109, 0
    %s112 = sadd.s32 0, 0
    %p113 = scmp.lt.s32.totalorder %s112, 0
    %s114 = scalar_select %p113, %s112, 0
    %p115 = scmp.lt.s32.totalorder %s114, 0
    %s116 = scalar_select %p115, %s114, 0
    %s117 = smul.addr %s116, 2
    %s118 = scalar_lea.vmem %s2, %s117
    %s119 = sadd.s32 0, 0
    %p120 = scmp.lt.s32.totalorder %s119, 0
    %s121 = scalar_select %p120, %s119, 0
    %s122 = sadd.s32 0, 0
    %p123 = scmp.lt.s32.totalorder %s122, 0
    %s124 = scalar_select %p123, %s122, 0
    %p125 = scmp.lt.s32.totalorder %s124, 0
    %s126 = scalar_select %p125, %s124, 0
    %s127 = smul.addr %s126, 2
    %s128 = scalar_lea.vmem %s3, %s127
    %s129 = sadd.s32 0, 0
    %p130 = scmp.lt.s32.totalorder %s129, 0
    %s131 = scalar_select %p130, %s129, 0
    %s132 = sadd.s32 0, 0
    %p133 = scmp.lt.s32.totalorder %s132, 0
    %s134 = scalar_select %p133, %s132, 0
    %p135 = scmp.lt.s32.totalorder %s134, 0
    %s136 = scalar_select %p135, %s134, 0
    %s137 = smul.addr %s136, 2
    %s138 = scalar_lea.vmem %s4, %s137
    %s139 = sadd.s32 0, 0
    %p140 = scmp.lt.s32.totalorder %s139, 0
    %s141 = scalar_select %p140, %s139, 0
    %p142 = scmp.eq.s32.totalorder 0, 0
    // Predicated region
    $region30: #{tpu_custom_call.1} parent=1 // pred_check
      %p143 = pneg %p142
    $region31: #{tpu_custom_call.1} parent=1 // pred_check_branch
      %145 = sbr.rel (%p143) target = $region33
    $region32: #{tpu_custom_call.1} parent=1 // pred_region
      %146 = vst [vmem:[#allocation7] sm:$0xff] 0.0
    $region33: #{tpu_custom_call.1} parent=1 // pred_fallthru
      _
    %s147 = sadd.s32 0, 0
    %s148 = smul.u32 %s147, 2
    %v149 = vlaneseq
    %v150 = vshrl.u32 %v149, 7
    %v151 = vstv %s148
    %v152 = vadd.s32 %v151, %v150
    %vm153 = vcmp.lt.s32.totalorder %v152, 2
    %v154 = vld [vmem:[#allocation2] sm:$0x3]
    %v155 = vld [vmem:[#allocation5] sm:$0x3]
    %v156 = vsub.f32 %v154, %v155
    %v157 = vld [vmem:[%s118] sm:$0x3]
    %159 = vrot.lane.b32.xlu0 %v157, 16
    %v160 = vpop.permute.xlu0 %159
    %v162 = vsub.f32 %v154, %v160
    %v163 = vmul.f32 %v156, %v156
    %v164 = vsel %vm153, 1, 0
    %vm165 = vcmp.eq.s32.totalorder %v164, 1
    %v166 = vsel %vm165, %v163, 0.0
    %vm167 = vcmask 123904
    %v168 = vsel %vm167, %v166, 0.0
    %169 = vadd.xlane.f32.xlu0 %v168
    %v170 = vpop.xlane.xlu0 %169
    %v171 = vrot.slane %v170, 4
    %v172 = vadd.f32 %v170, %v171
    %v173 = vrot.slane %v172, 2
    %v174 = vadd.f32 %v172, %v173
    %v175 = vrot.slane %v174, 1
    %v176 = vadd.f32 %v174, %v175
    %s177 = vtos %v176
    %v178 = vmul.f32 %v162, %v162
    %v179 = vsel %vm165, %v178, 0.0
    %181 = vrot.lane.b32.xlu0 %v179, 112
    %v182 = vpop.permute.xlu0 %181
    %v184 = vsel %vm167, %v182, 0.0
    %185 = vadd.xlane.f32.xlu0 %v184
    %v186 = vpop.xlane.xlu0 %185
    %v187 = vrot.slane %v186, 4
    %v188 = vadd.f32 %v186, %v187
    %v189 = vrot.slane %v188, 2
    %v190 = vadd.f32 %v188, %v189
    %v191 = vrot.slane %v190, 1
    %v192 = vadd.f32 %v190, %v191
    %s193 = vtos %v192
    %s194 = sadd.f32 %s177, %s193
    %v195 = vld [vmem:[%s138] sm:$0x3]
    %v196 = vld [vmem:[%s128] sm:$0x3]
    %v197 = vmul.f32 %v195, 1.442695
    %v198 = vpow.pop %v197
    %v199 = vmul.f32 %v196, %v196
    %v200 = vadd.f32 %v198, %v199
    %v201 = vsub.f32 %v200, 1.0
    %v202 = vsub.f32 %v201, %v195
    %v203 = vsel %vm165, %v202, 0.0
    %vm204 = vcmask 58368
    %v205 = vsel %vm204, %v203, 0.0
    %206 = vadd.xlane.f32.xlu0 %v205
    %v207 = vpop.xlane.xlu0 %206
    %v208 = vrot.slane %v207, 4
    %v209 = vadd.f32 %v207, %v208
    %v210 = vrot.slane %v209, 2
    %v211 = vadd.f32 %v209, %v210
    %v212 = vrot.slane %v211, 1
    %v213 = vadd.f32 %v211, %v212
    %s214 = vtos %v213
    %s215 = smul.f32 %s214, 0.5
    %v216 = vlaneseq
    %v217 = vand.u32 %v216, 127
    %vm218 = vcmp.eq.s32.totalorder %v150, 0
    %vm219 = vcmp.eq.s32.totalorder %v217, 0
    %vm220 = vmand %vm218, %vm219
    %v221 = vstv %s194
    %v222 = vsel %vm220, %v221, 0.0
    %vm223 = vcmp.eq.s32.totalorder %v217, 1
    %vm224 = vmand %vm218, %vm223
    %v225 = vstv %s215
    %v226 = vsel %vm224, %v225, 0.0
    %v227 = vadd.f32 %v222, %v226
    %v228 = vld [vmem:[#allocation7] sm:$0xff]
    %v229 = vadd.f32 %v228, %v227
    %230 = vst [vmem:[#allocation7] sm:$0xff] %v229
    // Predicated region
    $region34: #{tpu_custom_call.1} parent=1 // pred_check
      _
    $region35: #{tpu_custom_call.1} parent=1 // pred_check_branch
      %232 = sbr.rel (0) target = $region37
    $region36: #{tpu_custom_call.1} parent=1 // pred_region
      %s234 = ssub.s32 128, 128
      %235 = vsyncadd [#allocation4], %s234
      %s237 = sshll.u32 [#allocation7], 4
      %s238 = int_to_ptr.vmem [resolvable:$true] %s237
      %240 = dma.vmem_to_hbm [thread:$0]  %s238, 128, %s5, [#allocation4]
    $region37: #{tpu_custom_call.1} parent=1 // pred_fallthru
      _
    // Predicated region
    $region38: #{tpu_custom_call.1} parent=1 // pred_check
      _
    $region39: #{tpu_custom_call.1} parent=1 // pred_check_branch
      %242 = sbr.rel (0) target = $region41
    $region40: #{tpu_custom_call.1} parent=1 // pred_region
      %243 = dma.done [#allocation4], 128
    $region41: #{tpu_custom_call.1} parent=1 // pred_fallthru
      _
    %244 = vsyncpa [#allocation3], 1
    %245 = vsyncpa [#allocation6], 1
    %246 = vsyncpa [#allocation4], 1

</llo_original>
